<compile_context>
chip_gen: v5e
topology: v5e:2x2
jax: 0.10.0
libtpu: 0.0.40
codegen_flags: <defaults>
</compile_context>

<pallas_src>
import functools

import jax
import jax.numpy as jnp
import numpy as np
from jax.experimental import pallas as pl
from jax.experimental.pallas import tpu as pltpu

HIDDEN = 128
LANE = 128
NEG_BIG = -1e30  # bias on padded logit lanes -> exp() underflows to exactly 0


def _round_up(v, m):
    return ((v + m - 1) // m) * m


def _cdiv(a, b):
    return (a + b - 1) // b


def actor_kernel(x_ref, w1_ref, b1_ref, w2_ref, b2_ref, w3_ref, b3_ref, o_ref):
    # Matmul inputs follow the weight dtype (bf16 by default, f32 optional);
    # MXU accumulation and all elementwise / softmax work stay in f32.
    x = x_ref[...]

    # Layer 1: Linear + ReLU
    h1 = jnp.dot(x, w1_ref[...], preferred_element_type=jnp.float32) + b1_ref[...]
    h1 = jnp.maximum(h1, 0.0)

    # Layer 2: Linear + ReLU
    h2 = jnp.dot(h1.astype(w2_ref.dtype), w2_ref[...],
                 preferred_element_type=jnp.float32) + b2_ref[...]
    h2 = jnp.maximum(h2, 0.0)

    # Layer 3: Linear.  W3 is padded to a 128-lane multiple for the matmul; the
    # padded lanes have zero weights and a -1e30 bias, so exp() kills them.
    logits = jnp.dot(h2.astype(w3_ref.dtype), w3_ref[...],
                     preferred_element_type=jnp.float32) + b3_ref[...]

    # Numerically stable softmax along the (padded) action axis.
    m = jnp.max(logits, axis=-1, keepdims=True)
    e = jnp.exp(logits - m)
    denom = jnp.sum(e, axis=-1, keepdims=True)
    probs = e / denom  # exact divide: rows sum to 1 (PPO log-prob friendly)

    # Store only the real action lanes; the output array itself is unpadded.
    a = o_ref.shape[-1]
    o_ref[...] = probs[:, :a].astype(o_ref.dtype)


def prepare_actor_params(params, *, use_bf16_matmul=True):
    """One-time prep: pad the last layer to a 128-lane matmul width and cast
    weights to the matmul dtype.  Call once, reuse across forward calls."""
    w1, b1, w2, b2, w3, b3 = params
    A = w3.shape[1]
    A_pad = _round_up(max(A, LANE), LANE)
    w3p = jnp.pad(w3, ((0, 0), (0, A_pad - A)))
    b3p = jnp.pad(b3, ((0, 0), (0, A_pad - A)), constant_values=NEG_BIG)
    if use_bf16_matmul:
        w1c, w2c, w3c = (w.astype(jnp.bfloat16) for w in (w1, w2, w3p))
    else:
        w1c, w2c, w3c = w1, w2, w3p
    return (w1c, b1, w2c, b2, w3c, b3p)


@functools.partial(jax.jit, static_argnames=("action_size", "batch_tile"))
def actor_forward(x, prepared, *, action_size, batch_tile=1024):
    w1, b1, w2, b2, w3, b3 = prepared
    B, S = x.shape
    H = w1.shape[1]
    A_pad = w3.shape[1]
    A = action_size

    # Cast x in the wrapper so the streamed x DMA into the kernel is halved
    # when bf16 matmul inputs are enabled (no-op for the f32 path).
    x_in = x.astype(w1.dtype)

    # Batch tile: large (default 1024) to amortize the ~0.35us/step grid
    # overhead, but capped at ceil(B/2) (sublane-aligned) so the "parallel"
    # batch axis keeps >= 2 grid steps and both v7x TensorCores get work.
    tb = min(batch_tile, max(8, _round_up(_cdiv(B, 2), 8)))
    grid = (_cdiv(B, tb),)

    out = pl.pallas_call(
        actor_kernel,
        out_shape=jax.ShapeDtypeStruct((B, A), jnp.float32),
        grid=grid,
        in_specs=[
            pl.BlockSpec((tb, S), lambda i: (i, 0)),        # x: pipelined batch tiles
            pl.BlockSpec((S, H), lambda i: (0, 0)),         # weights/biases: VMEM-resident
            pl.BlockSpec((1, H), lambda i: (0, 0)),
            pl.BlockSpec((H, H), lambda i: (0, 0)),
            pl.BlockSpec((1, H), lambda i: (0, 0)),
            pl.BlockSpec((H, A_pad), lambda i: (0, 0)),
            pl.BlockSpec((1, A_pad), lambda i: (0, 0)),
        ],
        # Unpadded, dense output: last block dim equals the full array dim.
        out_specs=pl.BlockSpec((tb, A), lambda i: (i, 0)),
        compiler_params=pltpu.CompilerParams(
            dimension_semantics=("parallel",),  # v7x: shard batch tiles across 2 TCs
        ),
    )(x_in, w1, b1, w2, b2, w3, b3)

    return out


def init_params(key, state_size, action_size, hidden=HIDDEN):
    # Mimic PyTorch nn.Linear default init: U(-1/sqrt(fan_in), 1/sqrt(fan_in)).
    ks = jax.random.split(key, 6)

    def lin(kw, kb, fan_in, fan_out):
        bound = 1.0 / np.sqrt(fan_in)
        w = jax.random.uniform(kw, (fan_in, fan_out), jnp.float32, -bound, bound)
        b = jax.random.uniform(kb, (1, fan_out), jnp.float32, -bound, bound)
        return w, b

    w1, b1 = lin(ks[0], ks[1], state_size, hidden)
    w2, b2 = lin(ks[2], ks[3], hidden, hidden)
    w3, b3 = lin(ks[4], ks[5], hidden, action_size)
    return (w1, b1, w2, b2, w3, b3)


def actor_reference(x, params):
    w1, b1, w2, b2, w3, b3 = params
    h1 = jnp.maximum(x @ w1 + b1, 0.0)
    h2 = jnp.maximum(h1 @ w2 + b2, 0.0)
    logits = h2 @ w3 + b3
    return jax.nn.softmax(logits, axis=-1)


if __name__ == "__main__":
    key = jax.random.PRNGKey(0)
    k_in, k_par = jax.random.split(key)

    batch = 8
    state_size = 32
    action_size = 8

    x = jax.random.normal(k_in, (batch, state_size), dtype=jnp.float32)
    params = init_params(k_par, state_size, action_size)
    ref = actor_reference(x, params)

    # Default path: bf16 matmul inputs (native MXU dtype on v5e/v6e/v7x).
    prepared_bf16 = prepare_actor_params(params, use_bf16_matmul=True)
    out = actor_forward(x, prepared_bf16, action_size=action_size)
    out = jax.block_until_ready(out)
    assert out.shape == (batch, action_size)
    np.testing.assert_allclose(np.asarray(out), np.asarray(ref), rtol=5e-2, atol=5e-3)
    # Exact divide in the softmax -> rows sum to 1 within f32 rounding.
    np.testing.assert_allclose(np.asarray(out).sum(axis=-1), np.ones(batch),
                               rtol=0, atol=1e-5)

    # f32 path: tighter check of the fused math itself.
    prepared_f32 = prepare_actor_params(params, use_bf16_matmul=False)
    out_f32 = jax.block_until_ready(
        actor_forward(x, prepared_f32, action_size=action_size))
    np.testing.assert_allclose(np.asarray(out_f32), np.asarray(ref),
                               rtol=2e-3, atol=2e-3)

    # Also exercise the pipelined multi-tile path (grid > 1, partial last tile).
    big_x = jax.random.normal(k_in, (1000, state_size), dtype=jnp.float32)
    big_out = jax.block_until_ready(
        actor_forward(big_x, prepared_bf16, action_size=action_size))
    big_ref = actor_reference(big_x, params)
    np.testing.assert_allclose(np.asarray(big_out), np.asarray(big_ref),
                               rtol=5e-2, atol=5e-3)
    np.testing.assert_allclose(np.asarray(big_out).sum(axis=-1), np.ones(1000),
                               rtol=0, atol=1e-5)

    print("KERNEL_OK")
</pallas_src>

<mosaic_0001>
module attributes {stable_mosaic.version = 11 : i64} {
  func.func @actor_kernel(%arg0: i32, %arg1: memref<8x32xbf16, #tpu.memory_space<vmem>>, %arg2: memref<32x128xbf16, #tpu.memory_space<vmem>>, %arg3: memref<1x128xf32, #tpu.memory_space<vmem>>, %arg4: memref<128x128xbf16, #tpu.memory_space<vmem>>, %arg5: memref<1x128xf32, #tpu.memory_space<vmem>>, %arg6: memref<128x128xbf16, #tpu.memory_space<vmem>>, %arg7: memref<1x128xf32, #tpu.memory_space<vmem>>, %arg8: memref<8x8xf32, #tpu.memory_space<vmem>>) attributes {dimension_semantics = [#tpu.dimension_semantics<parallel>], iteration_bounds = array<i64: 1>, scalar_prefetch = 0 : i64, scratch_operands = 0 : i64, tpu.core_type = #tpu.core_type<tc>, window_params = [{transform_indices = @transform_0, window_bounds = array<i64: 8, 32>}, {pipeline_mode = #tpu.pipeline_mode<synchronous>, transform_indices = @transform_1, window_bounds = array<i64: 32, 128>}, {pipeline_mode = #tpu.pipeline_mode<synchronous>, transform_indices = @transform_2, window_bounds = array<i64: 1, 128>}, {pipeline_mode = #tpu.pipeline_mode<synchronous>, transform_indices = @transform_3, window_bounds = array<i64: 128, 128>}, {pipeline_mode = #tpu.pipeline_mode<synchronous>, transform_indices = @transform_4, window_bounds = array<i64: 1, 128>}, {pipeline_mode = #tpu.pipeline_mode<synchronous>, transform_indices = @transform_5, window_bounds = array<i64: 128, 128>}, {pipeline_mode = #tpu.pipeline_mode<synchronous>, transform_indices = @transform_6, window_bounds = array<i64: 1, 128>}, {transform_indices = @transform_7, window_bounds = array<i64: 8, 8>}]} {
    %c0 = arith.constant 0 : index
    %c0_0 = arith.constant 0 : index
    %0 = vector.load %arg1[%c0, %c0_0] : memref<8x32xbf16, #tpu.memory_space<vmem>>, vector<8x32xbf16>
    %c0_1 = arith.constant 0 : index
    %c0_2 = arith.constant 0 : index
    %1 = vector.load %arg2[%c0_1, %c0_2] : memref<32x128xbf16, #tpu.memory_space<vmem>>, vector<32x128xbf16>
    %cst = arith.constant dense<0.000000e+00> : vector<8x128xf32>
    %2 = tpu.matmul %0, %1, %cst {dimension_numbers = #tpu.dot_dimension_numbers<[1], [0], [0], [1], [0, 0, 1, 1], [], []>} : vector<8x32xbf16>, vector<32x128xbf16>, vector<8x128xf32> -> vector<8x128xf32>
    %c0_3 = arith.constant 0 : index
    %c0_4 = arith.constant 0 : index
    %3 = vector.load %arg3[%c0_3, %c0_4] : memref<1x128xf32, #tpu.memory_space<vmem>>, vector<1x128xf32>
    %4 = vector.broadcast %3 : vector<1x128xf32> to vector<8x128xf32>
    %5 = arith.addf %2, %4 : vector<8x128xf32>
    %cst_5 = arith.constant 0.000000e+00 : f32
    %6 = vector.broadcast %cst_5 : f32 to vector<8x128xf32>
    %7 = arith.maximumf %5, %6 : vector<8x128xf32>
    %8 = arith.truncf %7 : vector<8x128xf32> to vector<8x128xbf16>
    %c0_6 = arith.constant 0 : index
    %c0_7 = arith.constant 0 : index
    %9 = vector.load %arg4[%c0_6, %c0_7] : memref<128x128xbf16, #tpu.memory_space<vmem>>, vector<128x128xbf16>
    %cst_8 = arith.constant dense<0.000000e+00> : vector<8x128xf32>
    %10 = tpu.matmul %8, %9, %cst_8 {dimension_numbers = #tpu.dot_dimension_numbers<[1], [0], [0], [1], [0, 0, 1, 1], [], []>} : vector<8x128xbf16>, vector<128x128xbf16>, vector<8x128xf32> -> vector<8x128xf32>
    %c0_9 = arith.constant 0 : index
    %c0_10 = arith.constant 0 : index
    %11 = vector.load %arg5[%c0_9, %c0_10] : memref<1x128xf32, #tpu.memory_space<vmem>>, vector<1x128xf32>
    %12 = vector.broadcast %11 : vector<1x128xf32> to vector<8x128xf32>
    %13 = arith.addf %10, %12 : vector<8x128xf32>
    %cst_11 = arith.constant 0.000000e+00 : f32
    %14 = vector.broadcast %cst_11 : f32 to vector<8x128xf32>
    %15 = arith.maximumf %13, %14 : vector<8x128xf32>
    %16 = arith.truncf %15 : vector<8x128xf32> to vector<8x128xbf16>
    %c0_12 = arith.constant 0 : index
    %c0_13 = arith.constant 0 : index
    %17 = vector.load %arg6[%c0_12, %c0_13] : memref<128x128xbf16, #tpu.memory_space<vmem>>, vector<128x128xbf16>
    %cst_14 = arith.constant dense<0.000000e+00> : vector<8x128xf32>
    %18 = tpu.matmul %16, %17, %cst_14 {dimension_numbers = #tpu.dot_dimension_numbers<[1], [0], [0], [1], [0, 0, 1, 1], [], []>} : vector<8x128xbf16>, vector<128x128xbf16>, vector<8x128xf32> -> vector<8x128xf32>
    %c0_15 = arith.constant 0 : index
    %c0_16 = arith.constant 0 : index
    %19 = vector.load %arg7[%c0_15, %c0_16] : memref<1x128xf32, #tpu.memory_space<vmem>>, vector<1x128xf32>
    %20 = vector.broadcast %19 : vector<1x128xf32> to vector<8x128xf32>
    %21 = arith.addf %18, %20 : vector<8x128xf32>
    %cst_17 = arith.constant dense<0xFF800000> : vector<8xf32>
    %22 = vector.multi_reduction <maximumf>, %21, %cst_17 [1] : vector<8x128xf32> to vector<8xf32>
    %23 = vector.shape_cast %22 : vector<8xf32> to vector<8x1xf32>
    %24 = vector.broadcast %23 : vector<8x1xf32> to vector<8x128xf32>
    %25 = arith.subf %21, %24 : vector<8x128xf32>
    %26 = math.exp %25 : vector<8x128xf32>
    %cst_18 = arith.constant dense<0.000000e+00> : vector<8xf32>
    %27 = vector.multi_reduction <add>, %26, %cst_18 [1] : vector<8x128xf32> to vector<8xf32>
    %28 = vector.shape_cast %27 : vector<8xf32> to vector<8x1xf32>
    %29 = vector.broadcast %28 : vector<8x1xf32> to vector<8x128xf32>
    %30 = arith.divf %26, %29 : vector<8x128xf32>
    %31 = vector.extract_strided_slice %30 {offsets = [0, 0], sizes = [8, 8], strides = [1, 1]} : vector<8x128xf32> to vector<8x8xf32>
    %c0_19 = arith.constant 0 : index
    %c0_20 = arith.constant 0 : index
    %32 = vector.load %arg8[%c0_19, %c0_20] : memref<8x8xf32, #tpu.memory_space<vmem>>, vector<8x8xf32>
    tpu.vector_store %arg8[%c0_19, %c0_20], %31 {strides = array<i32>} : memref<8x8xf32, #tpu.memory_space<vmem>>, vector<8x8xf32>,
    return
  }
  func.func @transform_0(%arg0: i32) -> (i32, i32) {
    %c0_i32 = arith.constant 0 : i32
    %c0_i32_0 = arith.constant 0 : i32
    return %arg0, %c0_i32 : i32, i32
  }
  func.func @transform_1(%arg0: i32) -> (i32, i32) {
    %c0_i32 = arith.constant 0 : i32
    %c0_i32_0 = arith.constant 0 : i32
    %c0_i32_1 = arith.constant 0 : i32
    return %c0_i32, %c0_i32_0 : i32, i32
  }
  func.func @transform_2(%arg0: i32) -> (i32, i32) {
    %c0_i32 = arith.constant 0 : i32
    %c0_i32_0 = arith.constant 0 : i32
    %c0_i32_1 = arith.constant 0 : i32
    return %c0_i32, %c0_i32_0 : i32, i32
  }
  func.func @transform_3(%arg0: i32) -> (i32, i32) {
    %c0_i32 = arith.constant 0 : i32
    %c0_i32_0 = arith.constant 0 : i32
    %c0_i32_1 = arith.constant 0 : i32
    return %c0_i32, %c0_i32_0 : i32, i32
  }
  func.func @transform_4(%arg0: i32) -> (i32, i32) {
    %c0_i32 = arith.constant 0 : i32
    %c0_i32_0 = arith.constant 0 : i32
    %c0_i32_1 = arith.constant 0 : i32
    return %c0_i32, %c0_i32_0 : i32, i32
  }
  func.func @transform_5(%arg0: i32) -> (i32, i32) {
    %c0_i32 = arith.constant 0 : i32
    %c0_i32_0 = arith.constant 0 : i32
    %c0_i32_1 = arith.constant 0 : i32
    return %c0_i32, %c0_i32_0 : i32, i32
  }
  func.func @transform_6(%arg0: i32) -> (i32, i32) {
    %c0_i32 = arith.constant 0 : i32
    %c0_i32_0 = arith.constant 0 : i32
    %c0_i32_1 = arith.constant 0 : i32
    return %c0_i32, %c0_i32_0 : i32, i32
  }
  func.func @transform_7(%arg0: i32) -> (i32, i32) {
    %c0_i32 = arith.constant 0 : i32
    %c0_i32_0 = arith.constant 0 : i32
    return %arg0, %c0_i32 : i32, i32
  }
}

</mosaic_0001>

<llo_original>
// kernel: actor_forward.1
$region0: #{actor_forward.1}
  #allocation0 [shape = 'u32[]', space=smem, size = 0x4, offset = 0x4, fixed_abs, tag = 'smem constant byte address 0x4 - core index']
  #allocation1 [shape = 'u32[72,128]{1,0:T(1,128)}', space=vmem, size = 0x9000, scoped, tag = 'internal scratch']
  %s0 = inlined_call_operand.vmem [shape: bf16[8,32], index: 0, kind: input, shape index: {}]
  %s1 = inlined_call_operand.hbm [shape: bf16[32,128], index: 1, kind: input, shape index: {}]
  %s2 = inlined_call_operand.vmem [shape: f32[1,128], index: 2, kind: input, shape index: {}]
  %s3 = inlined_call_operand.hbm [shape: bf16[128,128], index: 3, kind: input, shape index: {}]
  %s4 = inlined_call_operand.vmem [shape: f32[1,128], index: 4, kind: input, shape index: {}]
  %s5 = inlined_call_operand.hbm [shape: bf16[128,128], index: 5, kind: input, shape index: {}]
  %s6 = inlined_call_operand.vmem [shape: f32[1,128], index: 6, kind: input, shape index: {}]
  %s7 = inlined_call_operand.hbm [shape: f32[8,8], index: 7, kind: output, shape index: {}]
  %s8 = sld [smem:[#allocation0]]
  $region50: #{actor_forward.1} parent=0
    _
  %s10 = ssub.s32 1, %s8
  %s11 = scalar_select 0, %s10, %s8
  $region1: #{actor_forward.1} parent=0
    #allocation2 [shape = 'u8[8192]{0}', space=vmem, size = 0x2000, scoped, tag = 'input window, operand 1, single buffered']
    #allocation3 [shape = 's32[1]{0}', space=sflag, size = 0x4, scoped, tag = 'scoped memory for actor_forward.1']
    #allocation4 [shape = 's32[1]{0}', space=sflag, size = 0x4, scoped, tag = 'scoped memory for actor_forward.1']
    #allocation5 [shape = 'u8[32768]{0}', space=vmem, size = 0x8000, scoped, tag = 'input window, operand 3, single buffered']
    #allocation6 [shape = 's32[1]{0}', space=sflag, size = 0x4, scoped, tag = 'scoped memory for actor_forward.1']
    #allocation7 [shape = 'u8[32768]{0}', space=vmem, size = 0x8000, scoped, tag = 'input window, operand 5, single buffered']
    #allocation8 [shape = 'u8[4096]{0}', space=vmem, size = 0x1000, scoped, tag = 'output window, operand 0, single buffered']
    %12 = vsyncpa [#allocation3], 0
    %13 = vsyncpa [#allocation6], 0
    %14 = vsyncpa [#allocation4], 0
    // Predicated region
    $region2: #{actor_forward.1} parent=1 // pred_check
      _
    $region3: #{actor_forward.1} parent=1 // pred_check_branch
      %16 = sbr.rel (0) target = $region5
    $region4: #{actor_forward.1} parent=1 // pred_region
      _
    $region5: #{actor_forward.1} parent=1 // pred_fallthru
      _
    // Predicated region
    $region6: #{actor_forward.1} parent=1 // pred_check
      _
    $region7: #{actor_forward.1} parent=1 // pred_check_branch
      %18 = sbr.rel (0) target = $region9
    $region8: #{actor_forward.1} parent=1 // pred_region
      %20 = vsyncadd [#allocation3], 0
      %s21 = sshll.u32 %s1, 4
      %s22 = int_to_ptr.hbm [resolvable:$true] %s21
      %s23 = sshll.u32 [#allocation2], 4
      %s24 = int_to_ptr.vmem [resolvable:$true] %s23
      %29 = dma.hbm_to_vmem [thread:$0]  %s22, 256, %s24, [#allocation3], 64, 64, 4
    $region9: #{actor_forward.1} parent=1 // pred_fallthru
      _
    // Predicated region
    $region10: #{actor_forward.1} parent=1 // pred_check
      _
    $region11: #{actor_forward.1} parent=1 // pred_check_branch
      %31 = sbr.rel (0) target = $region13
    $region12: #{actor_forward.1} parent=1 // pred_region
      _
    $region13: #{actor_forward.1} parent=1 // pred_fallthru
      _
    // Predicated region
    $region14: #{actor_forward.1} parent=1 // pred_check
      _
    $region15: #{actor_forward.1} parent=1 // pred_check_branch
      %33 = sbr.rel (0) target = $region17
    $region16: #{actor_forward.1} parent=1 // pred_region
      %35 = vsyncadd [#allocation6], 0
      %s36 = sshll.u32 %s3, 4
      %s37 = int_to_ptr.hbm [resolvable:$true] %s36
      %s38 = sshll.u32 [#allocation5], 4
      %s39 = int_to_ptr.vmem [resolvable:$true] %s38
      %44 = dma.hbm_to_vmem [thread:$0]  %s37, 1024, %s39, [#allocation6], 64, 64, 4
    $region17: #{actor_forward.1} parent=1 // pred_fallthru
      _
    // Predicated region
    $region18: #{actor_forward.1} parent=1 // pred_check
      _
    $region19: #{actor_forward.1} parent=1 // pred_check_branch
      %46 = sbr.rel (0) target = $region21
    $region20: #{actor_forward.1} parent=1 // pred_region
      _
    $region21: #{actor_forward.1} parent=1 // pred_fallthru
      _
    // Predicated region
    $region22: #{actor_forward.1} parent=1 // pred_check
      _
    $region23: #{actor_forward.1} parent=1 // pred_check_branch
      %48 = sbr.rel (0) target = $region25
    $region24: #{actor_forward.1} parent=1 // pred_region
      %50 = vsyncadd [#allocation6], 0
      %s51 = sshll.u32 %s5, 4
      %s52 = int_to_ptr.hbm [resolvable:$true] %s51
      %s53 = sshll.u32 [#allocation7], 4
      %s54 = int_to_ptr.vmem [resolvable:$true] %s53
      %59 = dma.hbm_to_vmem [thread:$0]  %s52, 1024, %s54, [#allocation6], 64, 64, 4
    $region25: #{actor_forward.1} parent=1 // pred_fallthru
      _
    // Predicated region
    $region26: #{actor_forward.1} parent=1 // pred_check
      _
    $region27: #{actor_forward.1} parent=1 // pred_check_branch
      %61 = sbr.rel (0) target = $region29
    $region28: #{actor_forward.1} parent=1 // pred_region
      _
    $region29: #{actor_forward.1} parent=1 // pred_fallthru
      _
    // Predicated region
    $region30: #{actor_forward.1} parent=1 // pred_check
      _
    $region31: #{actor_forward.1} parent=1 // pred_check_branch
      %63 = sbr.rel (0) target = $region33
    $region32: #{actor_forward.1} parent=1 // pred_region
      %65 = dma.done [#allocation3], 256
    $region33: #{actor_forward.1} parent=1 // pred_fallthru
      _
    // Predicated region
    $region34: #{actor_forward.1} parent=1 // pred_check
      _
    $region35: #{actor_forward.1} parent=1 // pred_check_branch
      %67 = sbr.rel (0) target = $region37
    $region36: #{actor_forward.1} parent=1 // pred_region
      %69 = dma.done [#allocation6], 1024
    $region37: #{actor_forward.1} parent=1 // pred_fallthru
      _
    // Predicated region
    $region38: #{actor_forward.1} parent=1 // pred_check
      _
    $region39: #{actor_forward.1} parent=1 // pred_check_branch
      %71 = sbr.rel (0) target = $region41
    $region40: #{actor_forward.1} parent=1 // pred_region
      %73 = dma.done [#allocation6], 1024
    $region41: #{actor_forward.1} parent=1 // pred_fallthru
      _
    %v75 = vld [vmem:[%s0] sm:$0xf]
    %v76 = vld [vmem:[#allocation2] sm:$0xf]
    %v77 = vld [vmem:[#allocation2 + $0x4] sm:$0xf]
    %v78 = vld [vmem:[#allocation2 + $0x8] sm:$0xf]
    %v79 = vld [vmem:[#allocation2 + $0xc] sm:$0xf]
    %v80 = vld [vmem:[%s2] sm:$0x1]
    %v82 = vperm.slane %v80, 0
    %v88 = vunpack.c.l.b16 %v76
    %v89 = vunpack.c.l.b16 %v77
    %v90 = vunpack.c.l.b16 %v78
    %v91 = vunpack.c.l.b16 %v79
    %v92 = vpack.c.b16 %v89, %v88
    %v93 = vpack.c.b16 %v91, %v90
    %vm96 = vcmask 261120
    %v98 = vsel %vm96, %v75, 0
    %100 = vmatpush.bf16.msra.mxu0 0
    %101 = vmatpush.bf16.msra.mxu0 0
    %102 = vmatpush.bf16.msra.mxu0 0
    %103 = vmatpush.bf16.msra.mxu0 0
    %104 = vmatpush.bf16.msra.mxu0 0
    %105 = vmatpush.bf16.msra.mxu0 0
    %106 = vmatpush.bf16.msra.mxu0 %v93
    %107 = vmatpush.bf16.msra.mxu0 %v92
    %108 = vmatmul.bf16.gmra.mxu0 %v98
    %v109 = vpop.f32.mrf.mxu0
    %v110 = vadd.f32 %v82, %v109
    %v111 = vpop.f32.mrf.mxu0
    %112 = vdwg.mxu0
    %v113 = vmax.f32 %v110, 0.0
    %v114 = vpack.c.bf16 %v113, %v113
    %v115 = vld [vmem:[#allocation5] sm:$0xf]
    %v116 = vld [vmem:[#allocation5 + $0x4] sm:$0xf]
    %v117 = vld [vmem:[#allocation5 + $0x8] sm:$0xf]
    %v118 = vld [vmem:[#allocation5 + $0xc] sm:$0xf]
    %v119 = vld [vmem:[#allocation5 + $0x10] sm:$0xf]
    %v120 = vld [vmem:[#allocation5 + $0x14] sm:$0xf]
    %v121 = vld [vmem:[#allocation5 + $0x18] sm:$0xf]
    %v122 = vld [vmem:[#allocation5 + $0x1c] sm:$0xf]
    %v123 = vld [vmem:[#allocation5 + $0x20] sm:$0xf]
    %v124 = vld [vmem:[#allocation5 + $0x24] sm:$0xf]
    %v125 = vld [vmem:[#allocation5 + $0x28] sm:$0xf]
    %v126 = vld [vmem:[#allocation5 + $0x2c] sm:$0xf]
    %v127 = vld [vmem:[#allocation5 + $0x30] sm:$0xf]
    %v128 = vld [vmem:[#allocation5 + $0x34] sm:$0xf]
    %v129 = vld [vmem:[#allocation5 + $0x38] sm:$0xf]
    %v130 = vld [vmem:[#allocation5 + $0x3c] sm:$0xf]
    %v131 = vld [vmem:[%s4] sm:$0x1]
    %v133 = vperm.slane %v131, 0
    %v151 = vunpack.c.l.b16 %v115
    %v152 = vunpack.c.l.b16 %v116
    %v153 = vunpack.c.l.b16 %v117
    %v154 = vunpack.c.l.b16 %v118
    %v155 = vunpack.c.l.b16 %v119
    %v156 = vunpack.c.l.b16 %v120
    %v157 = vunpack.c.l.b16 %v121
    %v158 = vunpack.c.l.b16 %v122
    %v159 = vunpack.c.l.b16 %v123
    %v160 = vunpack.c.l.b16 %v124
    %v161 = vunpack.c.l.b16 %v125
    %v162 = vunpack.c.l.b16 %v126
    %v163 = vunpack.c.l.b16 %v127
    %v164 = vunpack.c.l.b16 %v128
    %v165 = vunpack.c.l.b16 %v129
    %v166 = vunpack.c.l.b16 %v130
    %v167 = vpack.c.b16 %v152, %v151
    %v168 = vpack.c.b16 %v154, %v153
    %v169 = vpack.c.b16 %v156, %v155
    %v170 = vpack.c.b16 %v158, %v157
    %v171 = vpack.c.b16 %v160, %v159
    %v172 = vpack.c.b16 %v162, %v161
    %v173 = vpack.c.b16 %v164, %v163
    %v174 = vpack.c.b16 %v166, %v165
    %183 = vmatpush.bf16.msra.mxu0 %v174
    %184 = vmatpush.bf16.msra.mxu0 %v173
    %185 = vmatpush.bf16.msra.mxu0 %v172
    %186 = vmatpush.bf16.msra.mxu0 %v171
    %187 = vmatpush.bf16.msra.mxu0 %v170
    %188 = vmatpush.bf16.msra.mxu0 %v169
    %189 = vmatpush.bf16.msra.mxu0 %v168
    %190 = vmatpush.bf16.msra.mxu0 %v167
    %191 = vmatmul.bf16.gmra.mxu0 %v114
    %v192 = vpop.f32.mrf.mxu0
    %v193 = vadd.f32 %v133, %v192
    %v194 = vpop.f32.mrf.mxu0
    %195 = vdwg.mxu0
    %v196 = vmax.f32 %v193, 0.0
    %v197 = vpack.c.bf16 %v196, %v196
    %v198 = vld [vmem:[#allocation7] sm:$0xf]
    %v199 = vld [vmem:[#allocation7 + $0x4] sm:$0xf]
    %v200 = vld [vmem:[#allocation7 + $0x8] sm:$0xf]
    %v201 = vld [vmem:[#allocation7 + $0xc] sm:$0xf]
    %v202 = vld [vmem:[#allocation7 + $0x10] sm:$0xf]
    %v203 = vld [vmem:[#allocation7 + $0x14] sm:$0xf]
    %v204 = vld [vmem:[#allocation7 + $0x18] sm:$0xf]
    %v205 = vld [vmem:[#allocation7 + $0x1c] sm:$0xf]
    %v206 = vld [vmem:[#allocation7 + $0x20] sm:$0xf]
    %v207 = vld [vmem:[#allocation7 + $0x24] sm:$0xf]
    %v208 = vld [vmem:[#allocation7 + $0x28] sm:$0xf]
    %v209 = vld [vmem:[#allocation7 + $0x2c] sm:$0xf]
    %v210 = vld [vmem:[#allocation7 + $0x30] sm:$0xf]
    %v211 = vld [vmem:[#allocation7 + $0x34] sm:$0xf]
    %v212 = vld [vmem:[#allocation7 + $0x38] sm:$0xf]
    %v213 = vld [vmem:[#allocation7 + $0x3c] sm:$0xf]
    %v214 = vld [vmem:[%s6] sm:$0x1]
    %v216 = vperm.slane %v214, 0
    %v234 = vunpack.c.l.b16 %v198
    %v235 = vunpack.c.l.b16 %v199
    %v236 = vunpack.c.l.b16 %v200
    %v237 = vunpack.c.l.b16 %v201
    %v238 = vunpack.c.l.b16 %v202
    %v239 = vunpack.c.l.b16 %v203
    %v240 = vunpack.c.l.b16 %v204
    %v241 = vunpack.c.l.b16 %v205
    %v242 = vunpack.c.l.b16 %v206
    %v243 = vunpack.c.l.b16 %v207
    %v244 = vunpack.c.l.b16 %v208
    %v245 = vunpack.c.l.b16 %v209
    %v246 = vunpack.c.l.b16 %v210
    %v247 = vunpack.c.l.b16 %v211
    %v248 = vunpack.c.l.b16 %v212
    %v249 = vunpack.c.l.b16 %v213
    %v250 = vpack.c.b16 %v235, %v234
    %v251 = vpack.c.b16 %v237, %v236
    %v252 = vpack.c.b16 %v239, %v238
    %v253 = vpack.c.b16 %v241, %v240
    %v254 = vpack.c.b16 %v243, %v242
    %v255 = vpack.c.b16 %v245, %v244
    %v256 = vpack.c.b16 %v247, %v246
    %v257 = vpack.c.b16 %v249, %v248
    %266 = vmatpush.bf16.msra.mxu0 %v257
    %267 = vmatpush.bf16.msra.mxu0 %v256
    %268 = vmatpush.bf16.msra.mxu0 %v255
    %269 = vmatpush.bf16.msra.mxu0 %v254
    %270 = vmatpush.bf16.msra.mxu0 %v253
    %271 = vmatpush.bf16.msra.mxu0 %v252
    %272 = vmatpush.bf16.msra.mxu0 %v251
    %273 = vmatpush.bf16.msra.mxu0 %v250
    %274 = vmatmul.bf16.gmra.mxu0 %v197
    %v275 = vpop.f32.mrf.mxu0
    %v276 = vadd.f32 %v216, %v275
    %v277 = vpop.f32.mrf.mxu0
    %278 = vdwg.mxu0
    %279 = vmax.xlane.f32.xlu0 %v276
    %v280 = vpop.xlane.xlu0 %279
    %v281 = vsub.f32 %v276, %v280
    %v282 = vmul.f32 %v281, 1.442695
    %v283 = vpow.pop %v282
    %284 = vadd.xlane.f32.xlu0 %v283
    %v285 = vpop.xlane.xlu0 %284
    %v286 = vrcp.pop %v285
    %v287 = vmul.f32 %v285, %v286
    %v288 = vsub.f32 1.0, %v287
    %v289 = vmul.f32 %v286, %v288
    %v290 = vadd.f32 %v286, %v289
    %vm291 = vweird.f32 %v285
    %vm292 = vweird.f32 %v286
    %vm293 = vmor %vm291, %vm292
    %v294 = vsel %vm293, %v286, %v290
    %v295 = vand.u32 2147483647, %v285
    %vm296 = vcmp.eq.f32.partialorder %v295, 8.507059e+37
    %v297 = vand.u32 %v285, 2147483648
    %v298 = vor.u32 1.1754944e-38, %v297
    %v299 = vsel %vm296, %v298, %v294
    %v300 = vmul.f32 %v283, %v299
    %vm301 = vcmask 64512
    %302 = vst.msk [vmem:[#allocation8] sm:$0xff] %vm301, %v300
    // Predicated region
    $region42: #{actor_forward.1} parent=1 // pred_check
      _
    $region43: #{actor_forward.1} parent=1 // pred_check_branch
      %304 = sbr.rel (0) target = $region45
    $region44: #{actor_forward.1} parent=1 // pred_region
      %306 = vsyncadd [#allocation4], 0
      %s308 = sshll.u32 [#allocation8], 4
      %s309 = int_to_ptr.vmem [resolvable:$true] %s308
      %s310 = sshll.u32 %s7, 4
      %s311 = int_to_ptr.hbm [resolvable:$true] %s310
      %313 = dma.vmem_to_hbm [thread:$0]  %s309, 128, %s311, [#allocation4]
    $region45: #{actor_forward.1} parent=1 // pred_fallthru
      _
    // Predicated region
    $region46: #{actor_forward.1} parent=1 // pred_check
      _
    $region47: #{actor_forward.1} parent=1 // pred_check_branch
      %315 = sbr.rel (0) target = $region49
    $region48: #{actor_forward.1} parent=1 // pred_region
      %317 = dma.done [#allocation4], 128
    $region49: #{actor_forward.1} parent=1 // pred_fallthru
      _
    %318 = vsyncpa [#allocation3], 1
    %319 = vsyncpa [#allocation6], 1
    %320 = vsyncpa [#allocation4], 1

</llo_original>
